<compile_context>
chip_gen: v6e
topology: v6e:2x2x1
jax: 0.10.0
libtpu: 0.0.40
codegen_flags: <defaults>
</compile_context>

<pallas_src>
import functools

import jax
import jax.numpy as jnp
from jax.experimental import pallas as pl
from jax.experimental.pallas import tpu as pltpu

HIDDEN1 = 128
HIDDEN2 = 64

_VMEM_TILE_BUDGET = 40 * 1024 * 1024   # bytes for double-buffered x/out tiles
_VMEM_LIMIT = 48 * 1024 * 1024         # scoped VMEM limit (headroom on v7x 64 MiB)


def _ceil_to(v, m):
    return (v + m - 1) // m * m


def _tensorcores_per_chip():
    """Best-effort TC-per-chip query; defaults to 1 (v5e/v6e behavior)."""
    try:
        info = pltpu.get_tpu_info()
        for attr in ("num_tensorcores", "tensorcores_per_chip",
                     "num_cores", "cores_per_chip"):
            v = getattr(info, attr, None)
            if isinstance(v, int) and v > 0:
                return v
    except Exception:
        pass
    return 1


def _mlp_kernel(x_ref, w1_ref, b1_ref, w2_ref, b2_ref, w3_ref, b3_ref, o_ref):
    # Cast to bf16 in-kernel (avoids a full extra HBM read+write pass in XLA).
    x = x_ref[...].astype(jnp.bfloat16)
    # fc1 + ReLU   (dropout1 = identity in eval mode)
    h1 = jnp.dot(x, w1_ref[...], preferred_element_type=jnp.float32)
    h1 = jnp.maximum(h1 + b1_ref[...], 0.0)
    # fc2 + ReLU   (dropout2 = identity in eval mode)
    h2 = jnp.dot(h1.astype(jnp.bfloat16), w2_ref[...],
                 preferred_element_type=jnp.float32)
    h2 = jnp.maximum(h2 + b2_ref[...], 0.0)
    # output projection (lane dim = exact output_dim; no padding, no post-slice)
    out = jnp.dot(h2.astype(jnp.bfloat16), w3_ref[...],
                  preferred_element_type=jnp.float32)
    o_ref[...] = (out + b3_ref[...]).astype(o_ref.dtype)


def _pick_bm(B, input_dim, output_dim, block_m, resident_bytes):
    """Pick batch-tile rows: large tiles (kernel is grid-overhead / HBM bound at
    these feature dims), capped by a VMEM budget; ragged last tile is handled by
    Pallas write masking, so no host-side padding pass is needed."""
    # double-buffered f32 x tile + f32 out tile
    bytes_per_row = 2 * 4 * input_dim + 2 * 4 * output_dim
    budget = max(_VMEM_TILE_BUDGET - resident_bytes, 1 << 20)
    bm_vmem = max(128, budget // bytes_per_row // 128 * 128)
    bm = min(block_m, bm_vmem)
    if B <= bm:
        n_tc = _tensorcores_per_chip()
        if n_tc >= 2 and B >= 512:
            # v7x-class chips: give both TensorCores balanced >=256-row tiles.
            return _ceil_to(-(-B // n_tc), 8)
        return B                      # single full-array tile (no padding)
    return max(128, bm // 128 * 128)  # 128-aligned for clean MXU M streaming


@functools.partial(jax.jit, static_argnames=("block_m", "out_dtype"))
def mlp_forward(x, params, block_m=2048, out_dtype=jnp.float32):
    """x: [B, input_dim] float32. params: output of prepare_params()."""
    B, input_dim = x.shape
    w1, b1 = params["w1"], params["b1"]   # [input_dim,128] bf16, [1,128] f32
    w2, b2 = params["w2"], params["b2"]   # [128,64]        bf16, [1,64]  f32
    w3, b3 = params["w3"], params["b3"]   # [64,out]        bf16, [1,out] f32
    output_dim = w3.shape[1]

    resident_bytes = (2 * (w1.size + w2.size + w3.size)
                      + 4 * (b1.size + b2.size + b3.size))
    bm = _pick_bm(B, input_dim, output_dim, block_m, resident_bytes)
    grid = ((B + bm - 1) // bm,)

    # Weights/biases: whole arrays resident in VMEM, DMA'd once (no rotation).
    resident = pl.BlockSpec(memory_space=pltpu.MemorySpace.VMEM)

    return pl.pallas_call(
        _mlp_kernel,
        out_shape=jax.ShapeDtypeStruct((B, output_dim), out_dtype),
        grid_spec=pltpu.PrefetchScalarGridSpec(
            num_scalar_prefetch=0,
            grid=grid,
            in_specs=[
                pl.BlockSpec((bm, input_dim), lambda i: (i, 0)),  # x tile (f32)
                resident, resident,                               # w1, b1
                resident, resident,                               # w2, b2
                resident, resident,                               # w3, b3
            ],
            out_specs=pl.BlockSpec((bm, output_dim), lambda i: (i, 0)),
        ),
        compiler_params=pltpu.CompilerParams(
            dimension_semantics=("parallel",),
            vmem_limit_bytes=_VMEM_LIMIT),
    )(x, w1, b1, w2, b2, w3, b3)


def init_params(key, input_dim, output_dim):
    """Deterministic f32 init matching the nn.Linear layers, stored
    pre-transposed as [in, out] for the kernel."""
    k1, k2, k3, k4, k5, k6 = jax.random.split(key, 6)

    def lin(kw, kb, fan_in, fan_out):
        bound = 1.0 / jnp.sqrt(fan_in)
        w = jax.random.uniform(kw, (fan_in, fan_out), jnp.float32, -bound, bound)
        b = jax.random.uniform(kb, (1, fan_out), jnp.float32, -bound, bound)
        return w, b

    w1, b1 = lin(k1, k2, input_dim, HIDDEN1)
    w2, b2 = lin(k3, k4, HIDDEN1, HIDDEN2)
    w3, b3 = lin(k5, k6, HIDDEN2, output_dim)
    return {"w1": w1, "b1": b1, "w2": w2, "b2": b2, "w3": w3, "b3": b3}


def prepare_params(params):
    """One-time dtype prep: bf16 weights for the MXU, f32 biases.
    Done once here so no astype/pad ops land on the per-call launch path."""
    return {
        "w1": params["w1"].astype(jnp.bfloat16),
        "w2": params["w2"].astype(jnp.bfloat16),
        "w3": params["w3"].astype(jnp.bfloat16),
        "b1": params["b1"].astype(jnp.float32),
        "b2": params["b2"].astype(jnp.float32),
        "b3": params["b3"].astype(jnp.float32),
    }


def mlp_reference(x, p):
    h1 = jnp.maximum(x @ p["w1"] + p["b1"], 0.0)
    h2 = jnp.maximum(h1 @ p["w2"] + p["b2"], 0.0)
    return h2 @ p["w3"] + p["b3"]


if __name__ == "__main__":
    key = jax.random.PRNGKey(0)
    kx, kp = jax.random.split(key)

    # Small test shapes (exercise the un-padded small-batch / narrow-output path).
    batch, input_dim, output_dim = 10, 32, 10
    x = jax.random.normal(kx, (batch, input_dim), jnp.float32)
    params = init_params(kp, input_dim, output_dim)
    prepared = prepare_params(params)

    out = mlp_forward(x, prepared)
    out = jax.block_until_ready(out)

    ref = mlp_reference(x, params)   # f32 reference; kernel uses bf16 operands
    assert out.shape == (batch, output_dim)
    assert out.dtype == jnp.float32
    assert jnp.allclose(out, ref, atol=2e-2, rtol=2e-2), "mismatch vs reference"

    print("KERNEL_OK")
</pallas_src>

<mosaic_0001>
module attributes {stable_mosaic.version = 11 : i64} {
  func.func @_mlp_kernel(%arg0: i32, %arg1: memref<10x32xf32, #tpu.memory_space<vmem>>, %arg2: memref<32x128xbf16, #tpu.memory_space<vmem>>, %arg3: memref<1x128xf32, #tpu.memory_space<vmem>>, %arg4: memref<128x64xbf16, #tpu.memory_space<vmem>>, %arg5: memref<1x64xf32, #tpu.memory_space<vmem>>, %arg6: memref<64x10xbf16, #tpu.memory_space<vmem>>, %arg7: memref<1x10xf32, #tpu.memory_space<vmem>>, %arg8: memref<10x10xf32, #tpu.memory_space<vmem>>) attributes {dimension_semantics = [#tpu.dimension_semantics<parallel>], iteration_bounds = array<i64: 1>, scalar_prefetch = 0 : i64, scratch_operands = 0 : i64, tpu.core_type = #tpu.core_type<tc>, window_params = [{transform_indices = @transform_0, window_bounds = array<i64: 10, 32>}, {pipeline_mode = #tpu.pipeline_mode<synchronous>, transform_indices = @transform_1, window_bounds = array<i64: 32, 128>}, {pipeline_mode = #tpu.pipeline_mode<synchronous>, transform_indices = @transform_2, window_bounds = array<i64: 1, 128>}, {pipeline_mode = #tpu.pipeline_mode<synchronous>, transform_indices = @transform_3, window_bounds = array<i64: 128, 64>}, {pipeline_mode = #tpu.pipeline_mode<synchronous>, transform_indices = @transform_4, window_bounds = array<i64: 1, 64>}, {pipeline_mode = #tpu.pipeline_mode<synchronous>, transform_indices = @transform_5, window_bounds = array<i64: 64, 10>}, {pipeline_mode = #tpu.pipeline_mode<synchronous>, transform_indices = @transform_6, window_bounds = array<i64: 1, 10>}, {transform_indices = @transform_7, window_bounds = array<i64: 10, 10>}]} {
    %c0 = arith.constant 0 : index
    %c0_0 = arith.constant 0 : index
    %0 = vector.load %arg1[%c0, %c0_0] : memref<10x32xf32, #tpu.memory_space<vmem>>, vector<10x32xf32>
    %1 = arith.truncf %0 : vector<10x32xf32> to vector<10x32xbf16>
    %c0_1 = arith.constant 0 : index
    %c0_2 = arith.constant 0 : index
    %2 = vector.load %arg2[%c0_1, %c0_2] : memref<32x128xbf16, #tpu.memory_space<vmem>>, vector<32x128xbf16>
    %cst = arith.constant dense<0.000000e+00> : vector<10x128xf32>
    %3 = tpu.matmul %1, %2, %cst {dimension_numbers = #tpu.dot_dimension_numbers<[1], [0], [0], [1], [0, 0, 1, 1], [], []>} : vector<10x32xbf16>, vector<32x128xbf16>, vector<10x128xf32> -> vector<10x128xf32>
    %c0_3 = arith.constant 0 : index
    %c0_4 = arith.constant 0 : index
    %4 = vector.load %arg3[%c0_3, %c0_4] : memref<1x128xf32, #tpu.memory_space<vmem>>, vector<1x128xf32>
    %5 = vector.broadcast %4 : vector<1x128xf32> to vector<10x128xf32>
    %6 = arith.addf %3, %5 : vector<10x128xf32>
    %cst_5 = arith.constant 0.000000e+00 : f32
    %7 = vector.broadcast %cst_5 : f32 to vector<10x128xf32>
    %8 = arith.maximumf %6, %7 : vector<10x128xf32>
    %9 = arith.truncf %8 : vector<10x128xf32> to vector<10x128xbf16>
    %c0_6 = arith.constant 0 : index
    %c0_7 = arith.constant 0 : index
    %10 = vector.load %arg4[%c0_6, %c0_7] : memref<128x64xbf16, #tpu.memory_space<vmem>>, vector<128x64xbf16>
    %cst_8 = arith.constant dense<0.000000e+00> : vector<10x64xf32>
    %11 = tpu.matmul %9, %10, %cst_8 {dimension_numbers = #tpu.dot_dimension_numbers<[1], [0], [0], [1], [0, 0, 1, 1], [], []>} : vector<10x128xbf16>, vector<128x64xbf16>, vector<10x64xf32> -> vector<10x64xf32>
    %c0_9 = arith.constant 0 : index
    %c0_10 = arith.constant 0 : index
    %12 = vector.load %arg5[%c0_9, %c0_10] : memref<1x64xf32, #tpu.memory_space<vmem>>, vector<1x64xf32>
    %13 = vector.broadcast %12 : vector<1x64xf32> to vector<10x64xf32>
    %14 = arith.addf %11, %13 : vector<10x64xf32>
    %cst_11 = arith.constant 0.000000e+00 : f32
    %15 = vector.broadcast %cst_11 : f32 to vector<10x64xf32>
    %16 = arith.maximumf %14, %15 : vector<10x64xf32>
    %17 = arith.truncf %16 : vector<10x64xf32> to vector<10x64xbf16>
    %c0_12 = arith.constant 0 : index
    %c0_13 = arith.constant 0 : index
    %18 = vector.load %arg6[%c0_12, %c0_13] : memref<64x10xbf16, #tpu.memory_space<vmem>>, vector<64x10xbf16>
    %cst_14 = arith.constant dense<0.000000e+00> : vector<10x10xf32>
    %19 = tpu.matmul %17, %18, %cst_14 {dimension_numbers = #tpu.dot_dimension_numbers<[1], [0], [0], [1], [0, 0, 1, 1], [], []>} : vector<10x64xbf16>, vector<64x10xbf16>, vector<10x10xf32> -> vector<10x10xf32>
    %c0_15 = arith.constant 0 : index
    %c0_16 = arith.constant 0 : index
    %20 = vector.load %arg7[%c0_15, %c0_16] : memref<1x10xf32, #tpu.memory_space<vmem>>, vector<1x10xf32>
    %21 = vector.broadcast %20 : vector<1x10xf32> to vector<10x10xf32>
    %22 = arith.addf %19, %21 : vector<10x10xf32>
    %c0_17 = arith.constant 0 : index
    %c0_18 = arith.constant 0 : index
    %23 = vector.load %arg8[%c0_17, %c0_18] : memref<10x10xf32, #tpu.memory_space<vmem>>, vector<10x10xf32>
    tpu.vector_store %arg8[%c0_17, %c0_18], %22 {strides = array<i32>} : memref<10x10xf32, #tpu.memory_space<vmem>>, vector<10x10xf32>,
    return
  }
  func.func @transform_0(%arg0: i32) -> (i32, i32) {
    %c0_i32 = arith.constant 0 : i32
    %c0_i32_0 = arith.constant 0 : i32
    return %arg0, %c0_i32 : i32, i32
  }
  func.func @transform_1(%arg0: i32) -> (i32, i32) {
    %c0_i32 = arith.constant 0 : i32
    %c0_i32_0 = arith.constant 0 : i32
    %c0_i32_1 = arith.constant 0 : i32
    return %c0_i32, %c0_i32_0 : i32, i32
  }
  func.func @transform_2(%arg0: i32) -> (i32, i32) {
    %c0_i32 = arith.constant 0 : i32
    %c0_i32_0 = arith.constant 0 : i32
    %c0_i32_1 = arith.constant 0 : i32
    return %c0_i32, %c0_i32_0 : i32, i32
  }
  func.func @transform_3(%arg0: i32) -> (i32, i32) {
    %c0_i32 = arith.constant 0 : i32
    %c0_i32_0 = arith.constant 0 : i32
    %c0_i32_1 = arith.constant 0 : i32
    return %c0_i32, %c0_i32_0 : i32, i32
  }
  func.func @transform_4(%arg0: i32) -> (i32, i32) {
    %c0_i32 = arith.constant 0 : i32
    %c0_i32_0 = arith.constant 0 : i32
    %c0_i32_1 = arith.constant 0 : i32
    return %c0_i32, %c0_i32_0 : i32, i32
  }
  func.func @transform_5(%arg0: i32) -> (i32, i32) {
    %c0_i32 = arith.constant 0 : i32
    %c0_i32_0 = arith.constant 0 : i32
    %c0_i32_1 = arith.constant 0 : i32
    return %c0_i32, %c0_i32_0 : i32, i32
  }
  func.func @transform_6(%arg0: i32) -> (i32, i32) {
    %c0_i32 = arith.constant 0 : i32
    %c0_i32_0 = arith.constant 0 : i32
    %c0_i32_1 = arith.constant 0 : i32
    return %c0_i32, %c0_i32_0 : i32, i32
  }
  func.func @transform_7(%arg0: i32) -> (i32, i32) {
    %c0_i32 = arith.constant 0 : i32
    %c0_i32_0 = arith.constant 0 : i32
    return %arg0, %c0_i32 : i32, i32
  }
}

</mosaic_0001>

<llo_original>
// kernel: mlp_forward.1
$region0: #{mlp_forward.1}
  #allocation0 [shape = 'u32[]', space=smem, size = 0x4, offset = 0x4, fixed_abs, tag = 'smem constant byte address 0x4 - core index']
  #allocation1 [shape = 'u32[144,128]{1,0:T(1,128)}', space=vmem, size = 0x12000, scoped, tag = 'internal scratch']
  %s0 = inlined_call_operand.vmem [shape: f32[10,32], index: 0, kind: input, shape index: {}]
  %s1 = inlined_call_operand.vmem [shape: bf16[32,128], index: 1, kind: input, shape index: {}]
  %s2 = inlined_call_operand.vmem [shape: f32[1,128], index: 2, kind: input, shape index: {}]
  %s3 = inlined_call_operand.vmem [shape: bf16[128,64], index: 3, kind: input, shape index: {}]
  %s4 = inlined_call_operand.vmem [shape: f32[1,64], index: 4, kind: input, shape index: {}]
  %s5 = inlined_call_operand.vmem [shape: bf16[64,10], index: 5, kind: input, shape index: {}]
  %s6 = inlined_call_operand.vmem [shape: f32[1,10], index: 6, kind: input, shape index: {}]
  %s7 = inlined_call_operand.hbm [shape: f32[10,10], index: 7, kind: output, shape index: {}]
  %s8 = sld [smem:[#allocation0]]
  $region38: #{mlp_forward.1} parent=0
    _
  %s10 = ssub.s32 1, %s8
  %s11 = scalar_select 0, %s10, %s8
  $region1: #{mlp_forward.1} parent=0
    #allocation2 [shape = 'u8[8192]{0}', space=vmem, size = 0x2000, scoped, tag = 'output window, operand 0, single buffered']
    #allocation3 [shape = 's32[1]{0}', space=sflag, size = 0x4, scoped, tag = 'scoped memory for mlp_forward.1']
    %12 = vsyncpa [#allocation3], 0
    // Predicated region
    $region2: #{mlp_forward.1} parent=1 // pred_check
      _
    $region3: #{mlp_forward.1} parent=1 // pred_check_branch
      %14 = sbr.rel (0) target = $region5
    $region4: #{mlp_forward.1} parent=1 // pred_region
      _
    $region5: #{mlp_forward.1} parent=1 // pred_fallthru
      _
    // Predicated region
    $region6: #{mlp_forward.1} parent=1 // pred_check
      _
    $region7: #{mlp_forward.1} parent=1 // pred_check_branch
      %16 = sbr.rel (0) target = $region9
    $region8: #{mlp_forward.1} parent=1 // pred_region
      _
    $region9: #{mlp_forward.1} parent=1 // pred_fallthru
      _
    // Predicated region
    $region10: #{mlp_forward.1} parent=1 // pred_check
      _
    $region11: #{mlp_forward.1} parent=1 // pred_check_branch
      %18 = sbr.rel (0) target = $region13
    $region12: #{mlp_forward.1} parent=1 // pred_region
      _
    $region13: #{mlp_forward.1} parent=1 // pred_fallthru
      _
    // Predicated region
    $region14: #{mlp_forward.1} parent=1 // pred_check
      _
    $region15: #{mlp_forward.1} parent=1 // pred_check_branch
      %20 = sbr.rel (0) target = $region17
    $region16: #{mlp_forward.1} parent=1 // pred_region
      _
    $region17: #{mlp_forward.1} parent=1 // pred_fallthru
      _
    // Predicated region
    $region18: #{mlp_forward.1} parent=1 // pred_check
      _
    $region19: #{mlp_forward.1} parent=1 // pred_check_branch
      %22 = sbr.rel (0) target = $region21
    $region20: #{mlp_forward.1} parent=1 // pred_region
      _
    $region21: #{mlp_forward.1} parent=1 // pred_fallthru
      _
    // Predicated region
    $region22: #{mlp_forward.1} parent=1 // pred_check
      _
    $region23: #{mlp_forward.1} parent=1 // pred_check_branch
      %24 = sbr.rel (0) target = $region25
    $region24: #{mlp_forward.1} parent=1 // pred_region
      _
    $region25: #{mlp_forward.1} parent=1 // pred_fallthru
      _
    // Predicated region
    $region26: #{mlp_forward.1} parent=1 // pred_check
      _
    $region27: #{mlp_forward.1} parent=1 // pred_check_branch
      %26 = sbr.rel (0) target = $region29
    $region28: #{mlp_forward.1} parent=1 // pred_region
      _
    $region29: #{mlp_forward.1} parent=1 // pred_fallthru
      _
    %v28 = vld [vmem:[%s0] sm:$0xff]
    %v29 = vld [vmem:[%s0 + $0x8] sm:$0x3]
    %v30 = vpack.c.bf16 %v29, %v28
    %v31 = vld [vmem:[%s1] sm:$0xf]
    %v32 = vld [vmem:[%s1 + $0x4] sm:$0xf]
    %v33 = vld [vmem:[%s1 + $0x8] sm:$0xf]
    %v34 = vld [vmem:[%s1 + $0xc] sm:$0xf]
    %v35 = vld [vmem:[%s2] sm:$0x1]
    %v37 = vlaneseq
    %v38 = vshrl.u32 %v37, 7
    %v39 = vsub.s32 0, %v38
    %v40 = vrot.slane %v35, %v39
    %v46 = vunpack.c.l.b16 %v31
    %v47 = vunpack.c.l.b16 %v32
    %v48 = vunpack.c.l.b16 %v33
    %v49 = vunpack.c.l.b16 %v34
    %v50 = vpack.c.b16 %v47, %v46
    %v51 = vpack.c.b16 %v49, %v48
    %vm54 = vcmask 261120
    %v56 = vsel %vm54, %v30, 0
    %58 = vmatprep.subr.bf16.mxu0 0
    %59 = vmatpush1.bf16.msra.mxu0 0
    %60 = vmatprep.subr.bf16.mxu0 0
    %61 = vmatpush1.bf16.msra.mxu0 0
    %62 = vmatprep.subr.bf16.mxu0 0
    %63 = vmatpush1.bf16.msra.mxu0 0
    %64 = vmatprep.subr.bf16.mxu0 0
    %65 = vmatpush1.bf16.msra.mxu0 0
    %66 = vmatprep.subr.bf16.mxu0 0
    %67 = vmatpush1.bf16.msra.mxu0 0
    %68 = vmatprep.subr.bf16.mxu0 0
    %69 = vmatpush1.bf16.msra.mxu0 0
    %70 = vmatprep.subr.bf16.mxu0 0
    %71 = vmatpush1.bf16.msra.mxu0 %v51
    %72 = vmatprep.subr.bf16.mxu0 0
    %73 = vmatpush1.bf16.msra.mxu0 %v50
    %74 = vmatprep.subr.bf16.mxu0 0
    %75 = vmatpush2.bf16.msra.mxu0 0
    %76 = vmatprep.subr.bf16.mxu0 0
    %77 = vmatpush2.bf16.msra.mxu0 0
    %78 = vmatprep.subr.bf16.mxu0 0
    %79 = vmatpush2.bf16.msra.mxu0 0
    %80 = vmatprep.subr.bf16.mxu0 0
    %81 = vmatpush2.bf16.msra.mxu0 0
    %82 = vmatprep.subr.bf16.mxu0 0
    %83 = vmatpush2.bf16.msra.mxu0 0
    %84 = vmatprep.subr.bf16.mxu0 0
    %85 = vmatpush2.bf16.msra.mxu0 0
    %86 = vmatprep.subr.bf16.mxu0 0
    %87 = vmatpush2.bf16.msra.mxu0 0
    %88 = vmatprep.subr.bf16.mxu0 0
    %89 = vmatpush2.bf16.msra.mxu0 0
    %90 = vmatprep.mubr.bf16.mxu0 0
    %91 = vmatmul.mubr.bf16.gmra.mxu0 %v56
    %v92 = vpop.f32.mrf.mxu0
    %v93 = vadd.f32 %v40, %v92
    %v94 = vpop.f32.mrf.mxu0
    %v95 = vpop.f32.mrf.mxu0
    %v96 = vadd.f32 %v40, %v95
    %v97 = vpop.f32.mrf.mxu0
    %98 = vdwg.mxu0
    %v99 = vmax.f32 %v93, 0.0
    %v100 = vmax.f32 %v96, 0.0
    %v101 = vpack.c.bf16 %v100, %v99
    %v102 = vld [vmem:[%s3] sm:$0xf]
    %v103 = vld [vmem:[%s3 + $0x4] sm:$0xf]
    %v104 = vld [vmem:[%s3 + $0x8] sm:$0xf]
    %v105 = vld [vmem:[%s3 + $0xc] sm:$0xf]
    %v106 = vld [vmem:[%s3 + $0x10] sm:$0xf]
    %v107 = vld [vmem:[%s3 + $0x14] sm:$0xf]
    %v108 = vld [vmem:[%s3 + $0x18] sm:$0xf]
    %v109 = vld [vmem:[%s3 + $0x1c] sm:$0xf]
    %v110 = vld [vmem:[%s3 + $0x20] sm:$0xf]
    %v111 = vld [vmem:[%s3 + $0x24] sm:$0xf]
    %v112 = vld [vmem:[%s3 + $0x28] sm:$0xf]
    %v113 = vld [vmem:[%s3 + $0x2c] sm:$0xf]
    %v114 = vld [vmem:[%s3 + $0x30] sm:$0xf]
    %v115 = vld [vmem:[%s3 + $0x34] sm:$0xf]
    %v116 = vld [vmem:[%s3 + $0x38] sm:$0xf]
    %v117 = vld [vmem:[%s3 + $0x3c] sm:$0xf]
    %v118 = vld [vmem:[%s4] sm:$0x1]
    %v120 = vlaneseq
    %v121 = vshrl.u32 %v120, 7
    %v122 = vsub.s32 0, %v121
    %v123 = vrot.slane %v118, %v122
    %v141 = vunpack.c.l.b16 %v102
    %v142 = vunpack.c.l.b16 %v103
    %v143 = vunpack.c.l.b16 %v104
    %v144 = vunpack.c.l.b16 %v105
    %v145 = vunpack.c.l.b16 %v106
    %v146 = vunpack.c.l.b16 %v107
    %v147 = vunpack.c.l.b16 %v108
    %v148 = vunpack.c.l.b16 %v109
    %v149 = vunpack.c.l.b16 %v110
    %v150 = vunpack.c.l.b16 %v111
    %v151 = vunpack.c.l.b16 %v112
    %v152 = vunpack.c.l.b16 %v113
    %v153 = vunpack.c.l.b16 %v114
    %v154 = vunpack.c.l.b16 %v115
    %v155 = vunpack.c.l.b16 %v116
    %v156 = vunpack.c.l.b16 %v117
    %v157 = vpack.c.b16 %v142, %v141
    %v158 = vpack.c.b16 %v144, %v143
    %v159 = vpack.c.b16 %v146, %v145
    %v160 = vpack.c.b16 %v148, %v147
    %v161 = vpack.c.b16 %v150, %v149
    %v162 = vpack.c.b16 %v152, %v151
    %v163 = vpack.c.b16 %v154, %v153
    %v164 = vpack.c.b16 %v156, %v155
    %173 = vmatprep.subr.bf16.mxu0 0
    %174 = vmatpush1.bf16.msra.mxu0 %v164
    %175 = vmatprep.subr.bf16.mxu0 0
    %176 = vmatpush1.bf16.msra.mxu0 %v163
    %177 = vmatprep.subr.bf16.mxu0 0
    %178 = vmatpush1.bf16.msra.mxu0 %v162
    %179 = vmatprep.subr.bf16.mxu0 0
    %180 = vmatpush1.bf16.msra.mxu0 %v161
    %181 = vmatprep.subr.bf16.mxu0 0
    %182 = vmatpush1.bf16.msra.mxu0 %v160
    %183 = vmatprep.subr.bf16.mxu0 0
    %184 = vmatpush1.bf16.msra.mxu0 %v159
    %185 = vmatprep.subr.bf16.mxu0 0
    %186 = vmatpush1.bf16.msra.mxu0 %v158
    %187 = vmatprep.subr.bf16.mxu0 0
    %188 = vmatpush1.bf16.msra.mxu0 %v157
    %189 = vmatprep.subr.bf16.mxu0 0
    %190 = vmatpush2.bf16.msra.mxu0 0
    %191 = vmatprep.subr.bf16.mxu0 0
    %192 = vmatpush2.bf16.msra.mxu0 0
    %193 = vmatprep.subr.bf16.mxu0 0
    %194 = vmatpush2.bf16.msra.mxu0 0
    %195 = vmatprep.subr.bf16.mxu0 0
    %196 = vmatpush2.bf16.msra.mxu0 0
    %197 = vmatprep.subr.bf16.mxu0 0
    %198 = vmatpush2.bf16.msra.mxu0 0
    %199 = vmatprep.subr.bf16.mxu0 0
    %200 = vmatpush2.bf16.msra.mxu0 0
    %201 = vmatprep.subr.bf16.mxu0 0
    %202 = vmatpush2.bf16.msra.mxu0 0
    %203 = vmatprep.subr.bf16.mxu0 0
    %204 = vmatpush2.bf16.msra.mxu0 0
    %205 = vmatprep.mubr.bf16.mxu0 0
    %206 = vmatmul.mubr.bf16.gmra.mxu0 %v101
    %v207 = vpop.f32.mrf.mxu0
    %v208 = vadd.f32 %v123, %v207
    %v209 = vpop.f32.mrf.mxu0
    %v210 = vpop.f32.mrf.mxu0
    %v211 = vadd.f32 %v123, %v210
    %v212 = vpop.f32.mrf.mxu0
    %213 = vdwg.mxu0
    %v214 = vmax.f32 %v208, 0.0
    %v215 = vmax.f32 %v211, 0.0
    %v216 = vpack.c.bf16 %v215, %v214
    %v217 = vld [vmem:[%s5] sm:$0xf]
    %v218 = vld [vmem:[%s5 + $0x4] sm:$0xf]
    %v219 = vld [vmem:[%s5 + $0x8] sm:$0xf]
    %v220 = vld [vmem:[%s5 + $0xc] sm:$0xf]
    %v221 = vld [vmem:[%s5 + $0x10] sm:$0xf]
    %v222 = vld [vmem:[%s5 + $0x14] sm:$0xf]
    %v223 = vld [vmem:[%s5 + $0x18] sm:$0xf]
    %v224 = vld [vmem:[%s5 + $0x1c] sm:$0xf]
    %v225 = vld [vmem:[%s6] sm:$0x1]
    %v227 = vlaneseq
    %v228 = vshrl.u32 %v227, 7
    %v229 = vsub.s32 0, %v228
    %v230 = vrot.slane %v225, %v229
    %v240 = vunpack.c.l.b16 %v217
    %v241 = vunpack.c.l.b16 %v218
    %v242 = vunpack.c.l.b16 %v219
    %v243 = vunpack.c.l.b16 %v220
    %v244 = vunpack.c.l.b16 %v221
    %v245 = vunpack.c.l.b16 %v222
    %v246 = vunpack.c.l.b16 %v223
    %v247 = vunpack.c.l.b16 %v224
    %v248 = vpack.c.b16 %v241, %v240
    %v249 = vpack.c.b16 %v243, %v242
    %v250 = vpack.c.b16 %v245, %v244
    %v251 = vpack.c.b16 %v247, %v246
    %vm256 = vcmask 523264
    %v258 = vsel %vm256, %v216, 0
    %260 = vmatprep.subr.bf16.mxu0 0
    %261 = vmatpush1.bf16.msra.mxu0 0
    %262 = vmatprep.subr.bf16.mxu0 0
    %263 = vmatpush1.bf16.msra.mxu0 0
    %264 = vmatprep.subr.bf16.mxu0 0
    %265 = vmatpush1.bf16.msra.mxu0 0
    %266 = vmatprep.subr.bf16.mxu0 0
    %267 = vmatpush1.bf16.msra.mxu0 0
    %268 = vmatprep.subr.bf16.mxu0 0
    %269 = vmatpush1.bf16.msra.mxu0 %v251
    %270 = vmatprep.subr.bf16.mxu0 0
    %271 = vmatpush1.bf16.msra.mxu0 %v250
    %272 = vmatprep.subr.bf16.mxu0 0
    %273 = vmatpush1.bf16.msra.mxu0 %v249
    %274 = vmatprep.subr.bf16.mxu0 0
    %275 = vmatpush1.bf16.msra.mxu0 %v248
    %276 = vmatprep.subr.bf16.mxu0 0
    %277 = vmatpush2.bf16.msra.mxu0 0
    %278 = vmatprep.subr.bf16.mxu0 0
    %279 = vmatpush2.bf16.msra.mxu0 0
    %280 = vmatprep.subr.bf16.mxu0 0
    %281 = vmatpush2.bf16.msra.mxu0 0
    %282 = vmatprep.subr.bf16.mxu0 0
    %283 = vmatpush2.bf16.msra.mxu0 0
    %284 = vmatprep.subr.bf16.mxu0 0
    %285 = vmatpush2.bf16.msra.mxu0 0
    %286 = vmatprep.subr.bf16.mxu0 0
    %287 = vmatpush2.bf16.msra.mxu0 0
    %288 = vmatprep.subr.bf16.mxu0 0
    %289 = vmatpush2.bf16.msra.mxu0 0
    %290 = vmatprep.subr.bf16.mxu0 0
    %291 = vmatpush2.bf16.msra.mxu0 0
    %292 = vmatprep.mubr.bf16.mxu0 0
    %293 = vmatmul.mubr.bf16.gmra.mxu0 %v258
    %v294 = vpop.f32.mrf.mxu0
    %v295 = vadd.f32 %v230, %v294
    %v296 = vpop.f32.mrf.mxu0
    %v297 = vpop.f32.mrf.mxu0
    %v298 = vadd.f32 %v230, %v297
    %v299 = vpop.f32.mrf.mxu0
    %300 = vdwg.mxu0
    %vm301 = vcmask 80896
    %302 = vst.msk [vmem:[#allocation2] sm:$0xff] %vm301, %v295
    %vm303 = vcmask 74752
    %304 = vst.msk [vmem:[#allocation2 + $0x8] sm:$0x3] %vm303, %v298
    // Predicated region
    $region30: #{mlp_forward.1} parent=1 // pred_check
      _
    $region31: #{mlp_forward.1} parent=1 // pred_check_branch
      %306 = sbr.rel (0) target = $region33
    $region32: #{mlp_forward.1} parent=1 // pred_region
      %s308 = ssub.s32 256, 256
      %309 = vsyncadd [#allocation3], %s308
      %s310 = sshll.u32 [#allocation2], 4
      %s311 = int_to_ptr.vmem [resolvable:$true] %s310
      %316 = dma.vmem_to_hbm [thread:$0]  %s311, 256, %s7, [#allocation3], 128, 128, 8
    $region33: #{mlp_forward.1} parent=1 // pred_fallthru
      _
    // Predicated region
    $region34: #{mlp_forward.1} parent=1 // pred_check
      _
    $region35: #{mlp_forward.1} parent=1 // pred_check_branch
      %318 = sbr.rel (0) target = $region37
    $region36: #{mlp_forward.1} parent=1 // pred_region
      %319 = dma.done [#allocation3], 256
    $region37: #{mlp_forward.1} parent=1 // pred_fallthru
      _
    %320 = vsyncpa [#allocation3], 1

</llo_original>
